<compile_context>
chip_gen: v7x
topology: tpu7x:2x2x1
jax: 0.10.0
libtpu: 0.0.40
codegen_flags: <defaults>
</compile_context>

<pallas_src>
import numpy as np
import jax
import jax.numpy as jnp
from jax.experimental import pallas as pl
from jax.experimental.pallas import tpu as pltpu

# ----- module hyper-parameters (small, consistent with the forward) -----
B = 2
B_PAD = 8                        # pad batch to one full sublane group
OBS_SHAPE = (4, 16, 16)          # (C, H, W)
HIDDEN_DIM = 32                  # == encoder_feature_dim
N_ROT = 4                        # C_N group order
ACTION_DIM = 8                   # action_shape[0]; inv_act needs exactly 4 channels
LOG_STD_MIN = -10.0
LOG_STD_MAX = 2.0

FEAT_DIM = HIDDEN_DIM * N_ROT                              # 128 regular-repr channels
OBS_FLAT = OBS_SHAPE[0] * OBS_SHAPE[1] * OBS_SHAPE[2]      # 1024
HEAD_OUT = 2 * ACTION_DIM                                  # 2*irrep(1) + (2A-4)*trivial = 16
OUT_COLS = 4 * ACTION_DIM                                  # [mean | pi | log_std | log_pi bcast]


def actor_kernel(obs_ref, picker_ref, noise_ref,
                 wenc_ref, whf_ref, whp_ref, bh_ref,
                 out_ref):
    # encoder: (obs/255) @ W_enc == obs_bf16 @ (W_enc/255)_bf16  (normalization folded into weight)
    feat = jnp.maximum(
        jnp.dot(obs_ref[...], wenc_ref[...], preferred_element_type=jnp.float32), 0.0)

    # fused 1x1 R2Conv head: single (128,16) matmul; picker (K=2) contribution on the VPU.
    picker = picker_ref[...]                                           # (B_PAD, 2)
    head = (jnp.dot(feat, whf_ref[...], preferred_element_type=jnp.float32)
            + picker[:, 0:1] * whp_ref[0:1, :]
            + picker[:, 1:2] * whp_ref[1:2, :]
            + bh_ref[...])                                             # (B_PAD, 16)

    mean_lin = head[:, 0:ACTION_DIM]                                   # already interleaved
    ls_lin = head[:, ACTION_DIM:]

    # log_std = tanh(.) rescaled into [log_std_min, log_std_max]
    log_std = jnp.tanh(ls_lin)
    log_std = LOG_STD_MIN + 0.5 * (LOG_STD_MAX - LOG_STD_MIN) * (log_std + 1.0)

    # pi = mean + noise * std
    std = jnp.exp(log_std)
    noise = noise_ref[...]
    pi_pre = mean_lin + noise * std

    # gaussian_logprob(noise, log_std)
    log_pi = (jnp.sum(-0.5 * noise * noise - log_std, axis=-1, keepdims=True)
              - 0.5 * np.log(2.0 * np.pi) * ACTION_DIM)                # (B_PAD, 1)

    # squash
    mean = jnp.tanh(mean_lin)
    pi = jnp.tanh(pi_pre)
    log_pi = log_pi - jnp.sum(
        jnp.log(jnp.maximum(1.0 - pi * pi, 0.0) + 1e-6), axis=-1, keepdims=True)

    # single lane-contiguous output slab: [mean | pi | log_std | log_pi broadcast]
    out_ref[...] = jnp.concatenate(
        [mean, pi, log_std, jnp.broadcast_to(log_pi, (B_PAD, ACTION_DIM))], axis=-1)


_COST = pl.CostEstimate(
    flops=2 * B_PAD * OBS_FLAT * FEAT_DIM + 2 * B_PAD * (FEAT_DIM + 2) * HEAD_OUT,
    transcendentals=5 * B_PAD * ACTION_DIM,                # tanh x3, exp, log
    bytes_accessed=(OBS_FLAT * FEAT_DIM * 2                # bf16 encoder weight (dominant)
                    + B_PAD * OBS_FLAT * 2                 # bf16 obs
                    + (FEAT_DIM + 2) * HEAD_OUT * 4 + HEAD_OUT * 4
                    + B_PAD * (2 + ACTION_DIM + OUT_COLS) * 4),
)


@jax.jit
def actor_forward(obs, picker_state, noise, w_enc_bf16, w_head_f, w_head_p, b_head):
    bn = obs.shape[0]
    pad = B_PAD - bn
    obs_flat = obs.reshape(bn, -1).astype(jnp.bfloat16)
    obs_p = jnp.pad(obs_flat, ((0, pad), (0, 0)))
    pick_p = jnp.pad(picker_state, ((0, pad), (0, 0)))
    noise_p = jnp.pad(noise, ((0, pad), (0, 0)))

    vmem = pl.BlockSpec(memory_space=pltpu.MemorySpace.VMEM)
    out = pl.pallas_call(
        actor_kernel,
        out_shape=jax.ShapeDtypeStruct((B_PAD, OUT_COLS), jnp.float32),
        in_specs=[vmem] * 7,
        out_specs=vmem,
        cost_estimate=_COST,
    )(obs_p, pick_p, noise_p, w_enc_bf16, w_head_f, w_head_p, b_head)

    mean = out[:bn, 0:ACTION_DIM]
    pi = out[:bn, ACTION_DIM:2 * ACTION_DIM]
    log_std = out[:bn, 2 * ACTION_DIM:3 * ACTION_DIM]
    log_pi = out[:bn, 3 * ACTION_DIM:3 * ACTION_DIM + 1]
    return mean, pi, log_pi, log_std


def reference(obs, picker_state, noise, w_enc, w_mean, b_mean, w_ls, b_ls):
    """Pure-JAX f32 reference of the same forward (for a sanity check)."""
    x = obs.reshape(obs.shape[0], -1) / 255.0
    feat = jnp.maximum(x @ w_enc, 0.0)
    xin = jnp.concatenate([feat, picker_state], axis=-1)
    mean_lin = xin @ w_mean + b_mean
    ls_lin = xin @ w_ls + b_ls
    log_std = jnp.tanh(ls_lin)
    log_std = LOG_STD_MIN + 0.5 * (LOG_STD_MAX - LOG_STD_MIN) * (log_std + 1.0)
    std = jnp.exp(log_std)
    pi_pre = mean_lin + noise * std
    log_pi = (jnp.sum(-0.5 * noise ** 2 - log_std, axis=-1, keepdims=True)
              - 0.5 * np.log(2.0 * np.pi) * ACTION_DIM)
    mean = jnp.tanh(mean_lin)
    pi = jnp.tanh(pi_pre)
    log_pi = log_pi - jnp.sum(jnp.log(jnp.maximum(1.0 - pi ** 2, 0.0) + 1e-6),
                              axis=-1, keepdims=True)
    return mean, pi, log_pi, log_std


if __name__ == "__main__":
    key = jax.random.PRNGKey(0)
    k_obs, k_pick, k_noise, k_enc, k_head = jax.random.split(key, 5)

    # inputs
    obs = jax.random.uniform(k_obs, (B,) + OBS_SHAPE, jnp.float32, 0.0, 255.0)
    picker_state = jax.random.bernoulli(k_pick, 0.5, (B, 2)).astype(jnp.float32)
    # torch.randn_like(mean) inside forward -> generated host-side and fed to the kernel
    noise = jax.random.normal(k_noise, (B, ACTION_DIM), jnp.float32)

    # deterministic synthetic parameters (f32 "master" copies)
    w_enc = jax.random.normal(k_enc, (OBS_FLAT, FEAT_DIM), jnp.float32) / np.sqrt(OBS_FLAT)
    w_full = jax.random.normal(k_head, (FEAT_DIM + 2, HEAD_OUT), jnp.float32) / np.sqrt(FEAT_DIM + 2)
    # escnn: bias only on trivial output fields (channels 4:16); irrep(1) channels (0:4) get none.
    b_full = np.zeros((HEAD_OUT,), np.float32)
    b_full[4:] = 0.01 * np.arange(HEAD_OUT - 4, dtype=np.float32)
    b_full = jnp.asarray(b_full)

    # pre-permute head columns:  mean = conv_out[:, [0,4,1,5,2,6,3,7]], log_std = conv_out[:, 8:16]
    perm = jnp.array([0, 4, 1, 5, 2, 6, 3, 7], dtype=jnp.int32)
    w_mean = w_full[:, perm]
    b_mean = b_full[perm]
    w_ls = w_full[:, ACTION_DIM:]
    b_ls = b_full[ACTION_DIM:]

    # ---- one-time kernel parameter transforms (host side) ----
    # fold 1/255 into the encoder weight and cast to bf16 (dominant HBM transfer halved)
    w_enc_k = (w_enc / 255.0).astype(jnp.bfloat16)
    # fuse both heads into one (feat_in, 16) + (picker_in, 16) weight and a (1, 16) bias
    w_head = jnp.concatenate([w_mean, w_ls], axis=1)          # (130, 16)
    b_head = jnp.concatenate([b_mean, b_ls]).reshape(1, HEAD_OUT)
    w_head_f = w_head[:FEAT_DIM]                              # (128, 16)
    w_head_p = w_head[FEAT_DIM:]                              # (2, 16)

    outs = actor_forward(obs, picker_state, noise, w_enc_k, w_head_f, w_head_p, b_head)
    outs = jax.block_until_ready(outs)

    refs = reference(obs, picker_state, noise, w_enc, w_mean, b_mean, w_ls, b_ls)
    for o, r in zip(outs, refs):
        np.testing.assert_allclose(np.asarray(o), np.asarray(r), rtol=5e-2, atol=5e-2)

    print("KERNEL_OK")
</pallas_src>

<mosaic_0001>
module attributes {stable_mosaic.version = 11 : i64} {
  func.func @actor_kernel(%arg0: memref<8x1024xbf16, #tpu.memory_space<vmem>>, %arg1: memref<8x2xf32, #tpu.memory_space<vmem>>, %arg2: memref<8x8xf32, #tpu.memory_space<vmem>>, %arg3: memref<1024x128xbf16, #tpu.memory_space<vmem>>, %arg4: memref<128x16xf32, #tpu.memory_space<vmem>>, %arg5: memref<2x16xf32, #tpu.memory_space<vmem>>, %arg6: memref<1x16xf32, #tpu.memory_space<vmem>>, %arg7: memref<8x32xf32, #tpu.memory_space<vmem>>) attributes {dimension_semantics = [], scalar_prefetch = 0 : i64, scratch_operands = 0 : i64, tpu.core_type = #tpu.core_type<tc>} {
    %c0 = arith.constant 0 : index
    %c0_0 = arith.constant 0 : index
    %0 = vector.load %arg0[%c0, %c0_0] : memref<8x1024xbf16, #tpu.memory_space<vmem>>, vector<8x1024xbf16>
    %c0_1 = arith.constant 0 : index
    %c0_2 = arith.constant 0 : index
    %1 = vector.load %arg3[%c0_1, %c0_2] : memref<1024x128xbf16, #tpu.memory_space<vmem>>, vector<1024x128xbf16>
    %cst = arith.constant dense<0.000000e+00> : vector<8x128xf32>
    %2 = tpu.matmul %0, %1, %cst {dimension_numbers = #tpu.dot_dimension_numbers<[1], [0], [0], [1], [0, 0, 1, 1], [], []>} : vector<8x1024xbf16>, vector<1024x128xbf16>, vector<8x128xf32> -> vector<8x128xf32>
    %cst_3 = arith.constant 0.000000e+00 : f32
    %3 = vector.broadcast %cst_3 : f32 to vector<8x128xf32>
    %4 = arith.maximumf %2, %3 : vector<8x128xf32>
    %c0_4 = arith.constant 0 : index
    %c0_5 = arith.constant 0 : index
    %5 = vector.load %arg1[%c0_4, %c0_5] : memref<8x2xf32, #tpu.memory_space<vmem>>, vector<8x2xf32>
    %c0_6 = arith.constant 0 : index
    %c0_7 = arith.constant 0 : index
    %6 = vector.load %arg4[%c0_6, %c0_7] : memref<128x16xf32, #tpu.memory_space<vmem>>, vector<128x16xf32>
    %cst_8 = arith.constant dense<0.000000e+00> : vector<8x16xf32>
    %7 = tpu.matmul %4, %6, %cst_8 {dimension_numbers = #tpu.dot_dimension_numbers<[1], [0], [0], [1], [0, 0, 1, 1], [], []>} : vector<8x128xf32>, vector<128x16xf32>, vector<8x16xf32> -> vector<8x16xf32>
    %8 = vector.extract_strided_slice %5 {offsets = [0, 0], sizes = [8, 1], strides = [1, 1]} : vector<8x2xf32> to vector<8x1xf32>
    %c0_9 = arith.constant 0 : index
    %c0_10 = arith.constant 0 : index
    %9 = vector.load %arg5[%c0_9, %c0_10] : memref<2x16xf32, #tpu.memory_space<vmem>>, vector<1x16xf32>
    %10 = vector.broadcast %8 : vector<8x1xf32> to vector<8x16xf32>
    %11 = vector.broadcast %9 : vector<1x16xf32> to vector<8x16xf32>
    %12 = arith.mulf %10, %11 : vector<8x16xf32>
    %13 = arith.addf %7, %12 : vector<8x16xf32>
    %14 = vector.extract_strided_slice %5 {offsets = [0, 1], sizes = [8, 1], strides = [1, 1]} : vector<8x2xf32> to vector<8x1xf32>
    %c1 = arith.constant 1 : index
    %c0_11 = arith.constant 0 : index
    %15 = vector.load %arg5[%c1, %c0_11] : memref<2x16xf32, #tpu.memory_space<vmem>>, vector<1x16xf32>
    %16 = vector.broadcast %14 : vector<8x1xf32> to vector<8x16xf32>
    %17 = vector.broadcast %15 : vector<1x16xf32> to vector<8x16xf32>
    %18 = arith.mulf %16, %17 : vector<8x16xf32>
    %19 = arith.addf %13, %18 : vector<8x16xf32>
    %c0_12 = arith.constant 0 : index
    %c0_13 = arith.constant 0 : index
    %20 = vector.load %arg6[%c0_12, %c0_13] : memref<1x16xf32, #tpu.memory_space<vmem>>, vector<1x16xf32>
    %21 = vector.broadcast %20 : vector<1x16xf32> to vector<8x16xf32>
    %22 = arith.addf %19, %21 : vector<8x16xf32>
    %23 = vector.extract_strided_slice %22 {offsets = [0, 0], sizes = [8, 8], strides = [1, 1]} : vector<8x16xf32> to vector<8x8xf32>
    %24 = vector.extract_strided_slice %22 {offsets = [0, 8], sizes = [8, 8], strides = [1, 1]} : vector<8x16xf32> to vector<8x8xf32>
    %25 = math.tanh %24 : vector<8x8xf32>
    %cst_14 = arith.constant 1.000000e+00 : f32
    %26 = vector.broadcast %cst_14 : f32 to vector<8x8xf32>
    %27 = arith.addf %25, %26 : vector<8x8xf32>
    %cst_15 = arith.constant 6.000000e+00 : f32
    %28 = vector.broadcast %cst_15 : f32 to vector<8x8xf32>
    %29 = arith.mulf %28, %27 : vector<8x8xf32>
    %cst_16 = arith.constant -1.000000e+01 : f32
    %30 = vector.broadcast %cst_16 : f32 to vector<8x8xf32>
    %31 = arith.addf %30, %29 : vector<8x8xf32>
    %32 = math.exp %31 : vector<8x8xf32>
    %c0_17 = arith.constant 0 : index
    %c0_18 = arith.constant 0 : index
    %33 = vector.load %arg2[%c0_17, %c0_18] : memref<8x8xf32, #tpu.memory_space<vmem>>, vector<8x8xf32>
    %34 = arith.mulf %33, %32 : vector<8x8xf32>
    %35 = arith.addf %23, %34 : vector<8x8xf32>
    %cst_19 = arith.constant -5.000000e-01 : f32
    %36 = vector.broadcast %cst_19 : f32 to vector<8x8xf32>
    %37 = arith.mulf %36, %33 : vector<8x8xf32>
    %38 = arith.mulf %37, %33 : vector<8x8xf32>
    %39 = arith.subf %38, %31 : vector<8x8xf32>
    %cst_20 = arith.constant dense<0.000000e+00> : vector<8xf32>
    %40 = vector.multi_reduction <add>, %39, %cst_20 [1] : vector<8x8xf32> to vector<8xf32>
    %41 = vector.shape_cast %40 : vector<8xf32> to vector<8x1xf32>
    %cst_21 = arith.constant 7.35150814 : f32
    %42 = vector.broadcast %cst_21 : f32 to vector<8x1xf32>
    %43 = arith.subf %41, %42 : vector<8x1xf32>
    %44 = math.tanh %23 : vector<8x8xf32>
    %45 = math.tanh %35 : vector<8x8xf32>
    %46 = arith.mulf %45, %45 : vector<8x8xf32>
    %cst_22 = arith.constant 1.000000e+00 : f32
    %47 = vector.broadcast %cst_22 : f32 to vector<8x8xf32>
    %48 = arith.subf %47, %46 : vector<8x8xf32>
    %cst_23 = arith.constant 0.000000e+00 : f32
    %49 = vector.broadcast %cst_23 : f32 to vector<8x8xf32>
    %50 = arith.maximumf %48, %49 : vector<8x8xf32>
    %cst_24 = arith.constant 9.99999997E-7 : f32
    %51 = vector.broadcast %cst_24 : f32 to vector<8x8xf32>
    %52 = arith.addf %50, %51 : vector<8x8xf32>
    %53 = math.log %52 : vector<8x8xf32>
    %cst_25 = arith.constant dense<0.000000e+00> : vector<8xf32>
    %54 = vector.multi_reduction <add>, %53, %cst_25 [1] : vector<8x8xf32> to vector<8xf32>
    %55 = vector.shape_cast %54 : vector<8xf32> to vector<8x1xf32>
    %56 = arith.subf %43, %55 : vector<8x1xf32>
    %57 = vector.shape_cast %56 : vector<8x1xf32> to vector<8x1xf32>
    %58 = vector.broadcast %57 : vector<8x1xf32> to vector<8x8xf32>
    %59 = tpu.concatenate %44, %45, %31, %58 in 1 : vector<8x8xf32>, vector<8x8xf32>, vector<8x8xf32>, vector<8x8xf32> -> vector<8x32xf32>
    %c0_26 = arith.constant 0 : index
    %c0_27 = arith.constant 0 : index
    %60 = vector.load %arg7[%c0_26, %c0_27] : memref<8x32xf32, #tpu.memory_space<vmem>>, vector<8x32xf32>
    tpu.vector_store %arg7[%c0_26, %c0_27], %59 {strides = array<i32>} : memref<8x32xf32, #tpu.memory_space<vmem>>, vector<8x32xf32>,
    return
  }
}

</mosaic_0001>

<llo_original>
// kernel: actor_forward.1
$region0: #{actor_forward.1}
  #allocation0 [shape = 'u32[]', space=smem, size = 0x4, offset = 0x4, fixed_abs, tag = 'smem constant byte address 0x4 - core index']
  #allocation1 [shape = 'u32[144,128]{1,0:T(1,128)}', space=vmem, size = 0x12000, scoped, tag = 'internal scratch']
  %s0 = inlined_call_operand.vmem [shape: bf16[8,1024], index: 0, kind: input, shape index: {}]
  %s1 = inlined_call_operand.vmem [shape: f32[8,2], index: 1, kind: input, shape index: {}]
  %s2 = inlined_call_operand.vmem [shape: f32[8,8], index: 2, kind: input, shape index: {}]
  %s3 = inlined_call_operand.hbm [shape: bf16[1024,128], index: 3, kind: input, shape index: {}]
  %s4 = inlined_call_operand.vmem [shape: f32[128,16], index: 4, kind: input, shape index: {}]
  %s5 = inlined_call_operand.vmem [shape: f32[2,16], index: 5, kind: input, shape index: {}]
  %s6 = inlined_call_operand.vmem [shape: f32[1,16], index: 6, kind: input, shape index: {}]
  %s7 = inlined_call_operand.vmem [shape: f32[8,32], index: 7, kind: output, shape index: {}]
  %s8 = sld [smem:[#allocation0]]
  $region42: #{actor_forward.1} parent=0
    _
  %s10 = ssub.s32 1, %s8
  %s11 = scalar_select 0, %s10, %s8
  $region1: #{actor_forward.1} parent=0
    #allocation2 [shape = 'u8[262144]{0}', space=vmem, size = 0x40000, scoped, tag = 'input window, operand 3, single buffered']
    #allocation3 [shape = 's32[1]{0}', space=sflag, size = 0x4, scoped, tag = 'scoped memory for actor_forward.1']
    %12 = vsyncpa [#allocation3], 0
    // Predicated region
    $region2: #{actor_forward.1} parent=1 // pred_check
      _
    $region3: #{actor_forward.1} parent=1 // pred_check_branch
      %14 = sbr.rel (0) target = $region5
    $region4: #{actor_forward.1} parent=1 // pred_region
      _
    $region5: #{actor_forward.1} parent=1 // pred_fallthru
      _
    // Predicated region
    $region6: #{actor_forward.1} parent=1 // pred_check
      _
    $region7: #{actor_forward.1} parent=1 // pred_check_branch
      %16 = sbr.rel (0) target = $region9
    $region8: #{actor_forward.1} parent=1 // pred_region
      _
    $region9: #{actor_forward.1} parent=1 // pred_fallthru
      _
    // Predicated region
    $region10: #{actor_forward.1} parent=1 // pred_check
      _
    $region11: #{actor_forward.1} parent=1 // pred_check_branch
      %18 = sbr.rel (0) target = $region13
    $region12: #{actor_forward.1} parent=1 // pred_region
      _
    $region13: #{actor_forward.1} parent=1 // pred_fallthru
      _
    // Predicated region
    $region14: #{actor_forward.1} parent=1 // pred_check
      _
    $region15: #{actor_forward.1} parent=1 // pred_check_branch
      %20 = sbr.rel (0) target = $region17
    $region16: #{actor_forward.1} parent=1 // pred_region
      %s22 = ssub.s32 8192, 8192
      %23 = vsyncadd [#allocation3], %s22
      %s24 = sshll.u32 [#allocation2], 4
      %s25 = int_to_ptr.vmem [resolvable:$true] %s24
      %30 = dma.hbm_to_vmem [thread:$0]  %s3, 8192, %s25, [#allocation3], 64, 64, 4
    $region17: #{actor_forward.1} parent=1 // pred_fallthru
      _
    // Predicated region
    $region18: #{actor_forward.1} parent=1 // pred_check
      _
    $region19: #{actor_forward.1} parent=1 // pred_check_branch
      %32 = sbr.rel (0) target = $region21
    $region20: #{actor_forward.1} parent=1 // pred_region
      _
    $region21: #{actor_forward.1} parent=1 // pred_fallthru
      _
    // Predicated region
    $region22: #{actor_forward.1} parent=1 // pred_check
      _
    $region23: #{actor_forward.1} parent=1 // pred_check_branch
      %34 = sbr.rel (0) target = $region25
    $region24: #{actor_forward.1} parent=1 // pred_region
      _
    $region25: #{actor_forward.1} parent=1 // pred_fallthru
      _
    // Predicated region
    $region26: #{actor_forward.1} parent=1 // pred_check
      _
    $region27: #{actor_forward.1} parent=1 // pred_check_branch
      %36 = sbr.rel (0) target = $region29
    $region28: #{actor_forward.1} parent=1 // pred_region
      _
    $region29: #{actor_forward.1} parent=1 // pred_fallthru
      _
    // Predicated region
    $region30: #{actor_forward.1} parent=1 // pred_check
      _
    $region31: #{actor_forward.1} parent=1 // pred_check_branch
      %38 = sbr.rel (0) target = $region33
    $region32: #{actor_forward.1} parent=1 // pred_region
      %39 = dma.done [#allocation3], 8192
    $region33: #{actor_forward.1} parent=1 // pred_fallthru
      _
    %v41 = vld [vmem:[%s0] sm:$0xff]
    %v42 = vld [vmem:[%s0 + $0x8] sm:$0xff]
    %v43 = vld [vmem:[%s0 + $0x10] sm:$0xff]
    %v44 = vld [vmem:[%s0 + $0x18] sm:$0xff]
    %v45 = vld [vmem:[#allocation2] sm:$0xf]
    %v46 = vld [vmem:[#allocation2 + $0x4] sm:$0xf]
    %v47 = vld [vmem:[#allocation2 + $0x8] sm:$0xf]
    %v48 = vld [vmem:[#allocation2 + $0xc] sm:$0xf]
    %v49 = vld [vmem:[#allocation2 + $0x10] sm:$0xf]
    %v50 = vld [vmem:[#allocation2 + $0x14] sm:$0xf]
    %v51 = vld [vmem:[#allocation2 + $0x18] sm:$0xf]
    %v52 = vld [vmem:[#allocation2 + $0x1c] sm:$0xf]
    %v53 = vld [vmem:[#allocation2 + $0x20] sm:$0xf]
    %v54 = vld [vmem:[#allocation2 + $0x24] sm:$0xf]
    %v55 = vld [vmem:[#allocation2 + $0x28] sm:$0xf]
    %v56 = vld [vmem:[#allocation2 + $0x2c] sm:$0xf]
    %v57 = vld [vmem:[#allocation2 + $0x30] sm:$0xf]
    %v58 = vld [vmem:[#allocation2 + $0x34] sm:$0xf]
    %v59 = vld [vmem:[#allocation2 + $0x38] sm:$0xf]
    %v60 = vld [vmem:[#allocation2 + $0x3c] sm:$0xf]
    %v61 = vld [vmem:[#allocation2 + $0x40] sm:$0xf]
    %v62 = vld [vmem:[#allocation2 + $0x44] sm:$0xf]
    %v63 = vld [vmem:[#allocation2 + $0x48] sm:$0xf]
    %v64 = vld [vmem:[#allocation2 + $0x4c] sm:$0xf]
    %v65 = vld [vmem:[#allocation2 + $0x50] sm:$0xf]
    %v66 = vld [vmem:[#allocation2 + $0x54] sm:$0xf]
    %v67 = vld [vmem:[#allocation2 + $0x58] sm:$0xf]
    %v68 = vld [vmem:[#allocation2 + $0x5c] sm:$0xf]
    %v69 = vld [vmem:[#allocation2 + $0x60] sm:$0xf]
    %v70 = vld [vmem:[#allocation2 + $0x64] sm:$0xf]
    %v71 = vld [vmem:[#allocation2 + $0x68] sm:$0xf]
    %v72 = vld [vmem:[#allocation2 + $0x6c] sm:$0xf]
    %v73 = vld [vmem:[#allocation2 + $0x70] sm:$0xf]
    %v74 = vld [vmem:[#allocation2 + $0x74] sm:$0xf]
    %v75 = vld [vmem:[#allocation2 + $0x78] sm:$0xf]
    %v76 = vld [vmem:[#allocation2 + $0x7c] sm:$0xf]
    %v77 = vld [vmem:[#allocation2 + $0x80] sm:$0xf]
    %v78 = vld [vmem:[#allocation2 + $0x84] sm:$0xf]
    %v79 = vld [vmem:[#allocation2 + $0x88] sm:$0xf]
    %v80 = vld [vmem:[#allocation2 + $0x8c] sm:$0xf]
    %v81 = vld [vmem:[#allocation2 + $0x90] sm:$0xf]
    %v82 = vld [vmem:[#allocation2 + $0x94] sm:$0xf]
    %v83 = vld [vmem:[#allocation2 + $0x98] sm:$0xf]
    %v84 = vld [vmem:[#allocation2 + $0x9c] sm:$0xf]
    %v85 = vld [vmem:[#allocation2 + $0xa0] sm:$0xf]
    %v86 = vld [vmem:[#allocation2 + $0xa4] sm:$0xf]
    %v87 = vld [vmem:[#allocation2 + $0xa8] sm:$0xf]
    %v88 = vld [vmem:[#allocation2 + $0xac] sm:$0xf]
    %v89 = vld [vmem:[#allocation2 + $0xb0] sm:$0xf]
    %v90 = vld [vmem:[#allocation2 + $0xb4] sm:$0xf]
    %v91 = vld [vmem:[#allocation2 + $0xb8] sm:$0xf]
    %v92 = vld [vmem:[#allocation2 + $0xbc] sm:$0xf]
    %v93 = vld [vmem:[#allocation2 + $0xc0] sm:$0xf]
    %v94 = vld [vmem:[#allocation2 + $0xc4] sm:$0xf]
    %v95 = vld [vmem:[#allocation2 + $0xc8] sm:$0xf]
    %v96 = vld [vmem:[#allocation2 + $0xcc] sm:$0xf]
    %v97 = vld [vmem:[#allocation2 + $0xd0] sm:$0xf]
    %v98 = vld [vmem:[#allocation2 + $0xd4] sm:$0xf]
    %v99 = vld [vmem:[#allocation2 + $0xd8] sm:$0xf]
    %v100 = vld [vmem:[#allocation2 + $0xdc] sm:$0xf]
    %v101 = vld [vmem:[#allocation2 + $0xe0] sm:$0xf]
    %v102 = vld [vmem:[#allocation2 + $0xe4] sm:$0xf]
    %v103 = vld [vmem:[#allocation2 + $0xe8] sm:$0xf]
    %v104 = vld [vmem:[#allocation2 + $0xec] sm:$0xf]
    %v105 = vld [vmem:[#allocation2 + $0xf0] sm:$0xf]
    %v106 = vld [vmem:[#allocation2 + $0xf4] sm:$0xf]
    %v107 = vld [vmem:[#allocation2 + $0xf8] sm:$0xf]
    %v108 = vld [vmem:[#allocation2 + $0xfc] sm:$0xf]
    %v109 = vld [vmem:[#allocation2 + $0x100] sm:$0xf]
    %v110 = vld [vmem:[#allocation2 + $0x104] sm:$0xf]
    %v111 = vld [vmem:[#allocation2 + $0x108] sm:$0xf]
    %v112 = vld [vmem:[#allocation2 + $0x10c] sm:$0xf]
    %v113 = vld [vmem:[#allocation2 + $0x110] sm:$0xf]
    %v114 = vld [vmem:[#allocation2 + $0x114] sm:$0xf]
    %v115 = vld [vmem:[#allocation2 + $0x118] sm:$0xf]
    %v116 = vld [vmem:[#allocation2 + $0x11c] sm:$0xf]
    %v117 = vld [vmem:[#allocation2 + $0x120] sm:$0xf]
    %v118 = vld [vmem:[#allocation2 + $0x124] sm:$0xf]
    %v119 = vld [vmem:[#allocation2 + $0x128] sm:$0xf]
    %v120 = vld [vmem:[#allocation2 + $0x12c] sm:$0xf]
    %v121 = vld [vmem:[#allocation2 + $0x130] sm:$0xf]
    %v122 = vld [vmem:[#allocation2 + $0x134] sm:$0xf]
    %v123 = vld [vmem:[#allocation2 + $0x138] sm:$0xf]
    %v124 = vld [vmem:[#allocation2 + $0x13c] sm:$0xf]
    %v125 = vld [vmem:[#allocation2 + $0x140] sm:$0xf]
    %v126 = vld [vmem:[#allocation2 + $0x144] sm:$0xf]
    %v127 = vld [vmem:[#allocation2 + $0x148] sm:$0xf]
    %v128 = vld [vmem:[#allocation2 + $0x14c] sm:$0xf]
    %v129 = vld [vmem:[#allocation2 + $0x150] sm:$0xf]
    %v130 = vld [vmem:[#allocation2 + $0x154] sm:$0xf]
    %v131 = vld [vmem:[#allocation2 + $0x158] sm:$0xf]
    %v132 = vld [vmem:[#allocation2 + $0x15c] sm:$0xf]
    %v133 = vld [vmem:[#allocation2 + $0x160] sm:$0xf]
    %v134 = vld [vmem:[#allocation2 + $0x164] sm:$0xf]
    %v135 = vld [vmem:[#allocation2 + $0x168] sm:$0xf]
    %v136 = vld [vmem:[#allocation2 + $0x16c] sm:$0xf]
    %v137 = vld [vmem:[#allocation2 + $0x170] sm:$0xf]
    %v138 = vld [vmem:[#allocation2 + $0x174] sm:$0xf]
    %v139 = vld [vmem:[#allocation2 + $0x178] sm:$0xf]
    %v140 = vld [vmem:[#allocation2 + $0x17c] sm:$0xf]
    %v141 = vld [vmem:[#allocation2 + $0x180] sm:$0xf]
    %v142 = vld [vmem:[#allocation2 + $0x184] sm:$0xf]
    %v143 = vld [vmem:[#allocation2 + $0x188] sm:$0xf]
    %v144 = vld [vmem:[#allocation2 + $0x18c] sm:$0xf]
    %v145 = vld [vmem:[#allocation2 + $0x190] sm:$0xf]
    %v146 = vld [vmem:[#allocation2 + $0x194] sm:$0xf]
    %v147 = vld [vmem:[#allocation2 + $0x198] sm:$0xf]
    %v148 = vld [vmem:[#allocation2 + $0x19c] sm:$0xf]
    %v149 = vld [vmem:[#allocation2 + $0x1a0] sm:$0xf]
    %v150 = vld [vmem:[#allocation2 + $0x1a4] sm:$0xf]
    %v151 = vld [vmem:[#allocation2 + $0x1a8] sm:$0xf]
    %v152 = vld [vmem:[#allocation2 + $0x1ac] sm:$0xf]
    %v153 = vld [vmem:[#allocation2 + $0x1b0] sm:$0xf]
    %v154 = vld [vmem:[#allocation2 + $0x1b4] sm:$0xf]
    %v155 = vld [vmem:[#allocation2 + $0x1b8] sm:$0xf]
    %v156 = vld [vmem:[#allocation2 + $0x1bc] sm:$0xf]
    %v157 = vld [vmem:[#allocation2 + $0x1c0] sm:$0xf]
    %v158 = vld [vmem:[#allocation2 + $0x1c4] sm:$0xf]
    %v159 = vld [vmem:[#allocation2 + $0x1c8] sm:$0xf]
    %v160 = vld [vmem:[#allocation2 + $0x1cc] sm:$0xf]
    %v161 = vld [vmem:[#allocation2 + $0x1d0] sm:$0xf]
    %v162 = vld [vmem:[#allocation2 + $0x1d4] sm:$0xf]
    %v163 = vld [vmem:[#allocation2 + $0x1d8] sm:$0xf]
    %v164 = vld [vmem:[#allocation2 + $0x1dc] sm:$0xf]
    %v165 = vld [vmem:[#allocation2 + $0x1e0] sm:$0xf]
    %v166 = vld [vmem:[#allocation2 + $0x1e4] sm:$0xf]
    %v167 = vld [vmem:[#allocation2 + $0x1e8] sm:$0xf]
    %v168 = vld [vmem:[#allocation2 + $0x1ec] sm:$0xf]
    %v169 = vld [vmem:[#allocation2 + $0x1f0] sm:$0xf]
    %v170 = vld [vmem:[#allocation2 + $0x1f4] sm:$0xf]
    %v171 = vld [vmem:[#allocation2 + $0x1f8] sm:$0xf]
    %v172 = vld [vmem:[#allocation2 + $0x1fc] sm:$0xf]
    %v177 = vunpack.c.l.b16 %v41
    %v178 = vunpack.c.h.b16 %v41
    %v179 = vunpack.c.l.b16 %v42
    %v180 = vunpack.c.h.b16 %v42
    %v181 = vunpack.c.l.b16 %v43
    %v182 = vunpack.c.h.b16 %v43
    %v183 = vunpack.c.l.b16 %v44
    %v184 = vunpack.c.h.b16 %v44
    %v185 = vpack.c.b16 %v177, %v177
    %v186 = vpack.c.b16 %v178, %v178
    %v187 = vpack.c.b16 %v179, %v179
    %v188 = vpack.c.b16 %v180, %v180
    %v189 = vpack.c.b16 %v181, %v181
    %v190 = vpack.c.b16 %v182, %v182
    %v191 = vpack.c.b16 %v183, %v183
    %v192 = vpack.c.b16 %v184, %v184
    %v329 = vunpack.c.l.b16 %v45
    %v330 = vunpack.c.l.b16 %v46
    %v331 = vunpack.c.l.b16 %v47
    %v332 = vunpack.c.l.b16 %v48
    %v333 = vunpack.c.l.b16 %v49
    %v334 = vunpack.c.l.b16 %v50
    %v335 = vunpack.c.l.b16 %v51
    %v336 = vunpack.c.l.b16 %v52
    %v337 = vunpack.c.l.b16 %v53
    %v338 = vunpack.c.l.b16 %v54
    %v339 = vunpack.c.l.b16 %v55
    %v340 = vunpack.c.l.b16 %v56
    %v341 = vunpack.c.l.b16 %v57
    %v342 = vunpack.c.l.b16 %v58
    %v343 = vunpack.c.l.b16 %v59
    %v344 = vunpack.c.l.b16 %v60
    %v345 = vunpack.c.l.b16 %v61
    %v346 = vunpack.c.l.b16 %v62
    %v347 = vunpack.c.l.b16 %v63
    %v348 = vunpack.c.l.b16 %v64
    %v349 = vunpack.c.l.b16 %v65
    %v350 = vunpack.c.l.b16 %v66
    %v351 = vunpack.c.l.b16 %v67
    %v352 = vunpack.c.l.b16 %v68
    %v353 = vunpack.c.l.b16 %v69
    %v354 = vunpack.c.l.b16 %v70
    %v355 = vunpack.c.l.b16 %v71
    %v356 = vunpack.c.l.b16 %v72
    %v357 = vunpack.c.l.b16 %v73
    %v358 = vunpack.c.l.b16 %v74
    %v359 = vunpack.c.l.b16 %v75
    %v360 = vunpack.c.l.b16 %v76
    %v361 = vunpack.c.l.b16 %v77
    %v362 = vunpack.c.l.b16 %v78
    %v363 = vunpack.c.l.b16 %v79
    %v364 = vunpack.c.l.b16 %v80
    %v365 = vunpack.c.l.b16 %v81
    %v366 = vunpack.c.l.b16 %v82
    %v367 = vunpack.c.l.b16 %v83
    %v368 = vunpack.c.l.b16 %v84
    %v369 = vunpack.c.l.b16 %v85
    %v370 = vunpack.c.l.b16 %v86
    %v371 = vunpack.c.l.b16 %v87
    %v372 = vunpack.c.l.b16 %v88
    %v373 = vunpack.c.l.b16 %v89
    %v374 = vunpack.c.l.b16 %v90
    %v375 = vunpack.c.l.b16 %v91
    %v376 = vunpack.c.l.b16 %v92
    %v377 = vunpack.c.l.b16 %v93
    %v378 = vunpack.c.l.b16 %v94
    %v379 = vunpack.c.l.b16 %v95
    %v380 = vunpack.c.l.b16 %v96
    %v381 = vunpack.c.l.b16 %v97
    %v382 = vunpack.c.l.b16 %v98
    %v383 = vunpack.c.l.b16 %v99
    %v384 = vunpack.c.l.b16 %v100
    %v385 = vunpack.c.l.b16 %v101
    %v386 = vunpack.c.l.b16 %v102
    %v387 = vunpack.c.l.b16 %v103
    %v388 = vunpack.c.l.b16 %v104
    %v389 = vunpack.c.l.b16 %v105
    %v390 = vunpack.c.l.b16 %v106
    %v391 = vunpack.c.l.b16 %v107
    %v392 = vunpack.c.l.b16 %v108
    %v393 = vunpack.c.l.b16 %v109
    %v394 = vunpack.c.l.b16 %v110
    %v395 = vunpack.c.l.b16 %v111
    %v396 = vunpack.c.l.b16 %v112
    %v397 = vunpack.c.l.b16 %v113
    %v398 = vunpack.c.l.b16 %v114
    %v399 = vunpack.c.l.b16 %v115
    %v400 = vunpack.c.l.b16 %v116
    %v401 = vunpack.c.l.b16 %v117
    %v402 = vunpack.c.l.b16 %v118
    %v403 = vunpack.c.l.b16 %v119
    %v404 = vunpack.c.l.b16 %v120
    %v405 = vunpack.c.l.b16 %v121
    %v406 = vunpack.c.l.b16 %v122
    %v407 = vunpack.c.l.b16 %v123
    %v408 = vunpack.c.l.b16 %v124
    %v409 = vunpack.c.l.b16 %v125
    %v410 = vunpack.c.l.b16 %v126
    %v411 = vunpack.c.l.b16 %v127
    %v412 = vunpack.c.l.b16 %v128
    %v413 = vunpack.c.l.b16 %v129
    %v414 = vunpack.c.l.b16 %v130
    %v415 = vunpack.c.l.b16 %v131
    %v416 = vunpack.c.l.b16 %v132
    %v417 = vunpack.c.l.b16 %v133
    %v418 = vunpack.c.l.b16 %v134
    %v419 = vunpack.c.l.b16 %v135
    %v420 = vunpack.c.l.b16 %v136
    %v421 = vunpack.c.l.b16 %v137
    %v422 = vunpack.c.l.b16 %v138
    %v423 = vunpack.c.l.b16 %v139
    %v424 = vunpack.c.l.b16 %v140
    %v425 = vunpack.c.l.b16 %v141
    %v426 = vunpack.c.l.b16 %v142
    %v427 = vunpack.c.l.b16 %v143
    %v428 = vunpack.c.l.b16 %v144
    %v429 = vunpack.c.l.b16 %v145
    %v430 = vunpack.c.l.b16 %v146
    %v431 = vunpack.c.l.b16 %v147
    %v432 = vunpack.c.l.b16 %v148
    %v433 = vunpack.c.l.b16 %v149
    %v434 = vunpack.c.l.b16 %v150
    %v435 = vunpack.c.l.b16 %v151
    %v436 = vunpack.c.l.b16 %v152
    %v437 = vunpack.c.l.b16 %v153
    %v438 = vunpack.c.l.b16 %v154
    %v439 = vunpack.c.l.b16 %v155
    %v440 = vunpack.c.l.b16 %v156
    %v441 = vunpack.c.l.b16 %v157
    %v442 = vunpack.c.l.b16 %v158
    %v443 = vunpack.c.l.b16 %v159
    %v444 = vunpack.c.l.b16 %v160
    %v445 = vunpack.c.l.b16 %v161
    %v446 = vunpack.c.l.b16 %v162
    %v447 = vunpack.c.l.b16 %v163
    %v448 = vunpack.c.l.b16 %v164
    %v449 = vunpack.c.l.b16 %v165
    %v450 = vunpack.c.l.b16 %v166
    %v451 = vunpack.c.l.b16 %v167
    %v452 = vunpack.c.l.b16 %v168
    %v453 = vunpack.c.l.b16 %v169
    %v454 = vunpack.c.l.b16 %v170
    %v455 = vunpack.c.l.b16 %v171
    %v456 = vunpack.c.l.b16 %v172
    %v457 = vpack.c.b16 %v330, %v329
    %v458 = vpack.c.b16 %v332, %v331
    %v459 = vpack.c.b16 %v334, %v333
    %v460 = vpack.c.b16 %v336, %v335
    %v461 = vpack.c.b16 %v338, %v337
    %v462 = vpack.c.b16 %v340, %v339
    %v463 = vpack.c.b16 %v342, %v341
    %v464 = vpack.c.b16 %v344, %v343
    %v465 = vpack.c.b16 %v346, %v345
    %v466 = vpack.c.b16 %v348, %v347
    %v467 = vpack.c.b16 %v350, %v349
    %v468 = vpack.c.b16 %v352, %v351
    %v469 = vpack.c.b16 %v354, %v353
    %v470 = vpack.c.b16 %v356, %v355
    %v471 = vpack.c.b16 %v358, %v357
    %v472 = vpack.c.b16 %v360, %v359
    %v473 = vpack.c.b16 %v362, %v361
    %v474 = vpack.c.b16 %v364, %v363
    %v475 = vpack.c.b16 %v366, %v365
    %v476 = vpack.c.b16 %v368, %v367
    %v477 = vpack.c.b16 %v370, %v369
    %v478 = vpack.c.b16 %v372, %v371
    %v479 = vpack.c.b16 %v374, %v373
    %v480 = vpack.c.b16 %v376, %v375
    %v481 = vpack.c.b16 %v378, %v377
    %v482 = vpack.c.b16 %v380, %v379
    %v483 = vpack.c.b16 %v382, %v381
    %v484 = vpack.c.b16 %v384, %v383
    %v485 = vpack.c.b16 %v386, %v385
    %v486 = vpack.c.b16 %v388, %v387
    %v487 = vpack.c.b16 %v390, %v389
    %v488 = vpack.c.b16 %v392, %v391
    %v489 = vpack.c.b16 %v394, %v393
    %v490 = vpack.c.b16 %v396, %v395
    %v491 = vpack.c.b16 %v398, %v397
    %v492 = vpack.c.b16 %v400, %v399
    %v493 = vpack.c.b16 %v402, %v401
    %v494 = vpack.c.b16 %v404, %v403
    %v495 = vpack.c.b16 %v406, %v405
    %v496 = vpack.c.b16 %v408, %v407
    %v497 = vpack.c.b16 %v410, %v409
    %v498 = vpack.c.b16 %v412, %v411
    %v499 = vpack.c.b16 %v414, %v413
    %v500 = vpack.c.b16 %v416, %v415
    %v501 = vpack.c.b16 %v418, %v417
    %v502 = vpack.c.b16 %v420, %v419
    %v503 = vpack.c.b16 %v422, %v421
    %v504 = vpack.c.b16 %v424, %v423
    %v505 = vpack.c.b16 %v426, %v425
    %v506 = vpack.c.b16 %v428, %v427
    %v507 = vpack.c.b16 %v430, %v429
    %v508 = vpack.c.b16 %v432, %v431
    %v509 = vpack.c.b16 %v434, %v433
    %v510 = vpack.c.b16 %v436, %v435
    %v511 = vpack.c.b16 %v438, %v437
    %v512 = vpack.c.b16 %v440, %v439
    %v513 = vpack.c.b16 %v442, %v441
    %v514 = vpack.c.b16 %v444, %v443
    %v515 = vpack.c.b16 %v446, %v445
    %v516 = vpack.c.b16 %v448, %v447
    %v517 = vpack.c.b16 %v450, %v449
    %v518 = vpack.c.b16 %v452, %v451
    %v519 = vpack.c.b16 %v454, %v453
    %v520 = vpack.c.b16 %v456, %v455
    %585 = vmatprep.subr.bf16.mxu0 0
    %586 = vmatpush1.bf16.msra.mxu0 %v457
    %587 = vmatprep.subr.bf16.mxu0 0
    %588 = vmatpush1.bf16.msra.mxu0 %v458
    %589 = vmatprep.subr.bf16.mxu0 0
    %590 = vmatpush1.bf16.msra.mxu0 %v459
    %591 = vmatprep.subr.bf16.mxu0 0
    %592 = vmatpush1.bf16.msra.mxu0 %v460
    %593 = vmatprep.subr.bf16.mxu0 0
    %594 = vmatpush1.bf16.msra.mxu0 %v461
    %595 = vmatprep.subr.bf16.mxu0 0
    %596 = vmatpush1.bf16.msra.mxu0 %v462
    %597 = vmatprep.subr.bf16.mxu0 0
    %598 = vmatpush1.bf16.msra.mxu0 %v463
    %599 = vmatprep.subr.bf16.mxu0 0
    %600 = vmatpush1.bf16.msra.mxu0 %v464
    %601 = vmatprep.subr.bf16.mxu0 0
    %602 = vmatpush1.bf16.msra.mxu0 %v465
    %603 = vmatprep.subr.bf16.mxu0 0
    %604 = vmatpush1.bf16.msra.mxu0 %v466
    %605 = vmatprep.subr.bf16.mxu0 0
    %606 = vmatpush1.bf16.msra.mxu0 %v467
    %607 = vmatprep.subr.bf16.mxu0 0
    %608 = vmatpush1.bf16.msra.mxu0 %v468
    %609 = vmatprep.subr.bf16.mxu0 0
    %610 = vmatpush1.bf16.msra.mxu0 %v469
    %611 = vmatprep.subr.bf16.mxu0 0
    %612 = vmatpush1.bf16.msra.mxu0 %v470
    %613 = vmatprep.subr.bf16.mxu0 0
    %614 = vmatpush1.bf16.msra.mxu0 %v471
    %615 = vmatprep.subr.bf16.mxu0 0
    %616 = vmatpush1.bf16.msra.mxu0 %v472
    %617 = vmatprep.mubr.bf16.mxu0 %v186
    %618 = vmatmul.mubr.bf16.gmra.mrb[0].mxu0 %v185
    %v619 = vpop.f32.mrb[0].mxu0
    %v620 = vadd.f32 0.0, %v619
    %v621 = vpop.f32.mrb[0].mxu0
    %v622 = vpop.f32.mrb[0].mxu0
    %v623 = vpop.f32.mrb[0].mxu0
    %624 = vdwg.mxu0
    %625 = vmatprep.subr.bf16.mxu0 0
    %626 = vmatpush1.bf16.msra.mxu0 %v473
    %627 = vmatprep.subr.bf16.mxu0 0
    %628 = vmatpush1.bf16.msra.mxu0 %v474
    %629 = vmatprep.subr.bf16.mxu0 0
    %630 = vmatpush1.bf16.msra.mxu0 %v475
    %631 = vmatprep.subr.bf16.mxu0 0
    %632 = vmatpush1.bf16.msra.mxu0 %v476
    %633 = vmatprep.subr.bf16.mxu0 0
    %634 = vmatpush1.bf16.msra.mxu0 %v477
    %635 = vmatprep.subr.bf16.mxu0 0
    %636 = vmatpush1.bf16.msra.mxu0 %v478
    %637 = vmatprep.subr.bf16.mxu0 0
    %638 = vmatpush1.bf16.msra.mxu0 %v479
    %639 = vmatprep.subr.bf16.mxu0 0
    %640 = vmatpush1.bf16.msra.mxu0 %v480
    %641 = vmatprep.subr.bf16.mxu0 0
    %642 = vmatpush1.bf16.msra.mxu0 %v481
    %643 = vmatprep.subr.bf16.mxu0 0
    %644 = vmatpush1.bf16.msra.mxu0 %v482
    %645 = vmatprep.subr.bf16.mxu0 0
    %646 = vmatpush1.bf16.msra.mxu0 %v483
    %647 = vmatprep.subr.bf16.mxu0 0
    %648 = vmatpush1.bf16.msra.mxu0 %v484
    %649 = vmatprep.subr.bf16.mxu0 0
    %650 = vmatpush1.bf16.msra.mxu0 %v485
    %651 = vmatprep.subr.bf16.mxu0 0
    %652 = vmatpush1.bf16.msra.mxu0 %v486
    %653 = vmatprep.subr.bf16.mxu0 0
    %654 = vmatpush1.bf16.msra.mxu0 %v487
    %655 = vmatprep.subr.bf16.mxu0 0
    %656 = vmatpush1.bf16.msra.mxu0 %v488
    %657 = vmatprep.mubr.bf16.mxu0 %v188
    %658 = vmatmul.mubr.bf16.gmra.mrb[0].mxu0 %v187
    %v659 = vpop.f32.mrb[0].mxu0
    %v660 = vadd.f32 %v620, %v659
    %v661 = vpop.f32.mrb[0].mxu0
    %v662 = vpop.f32.mrb[0].mxu0
    %v663 = vpop.f32.mrb[0].mxu0
    %664 = vdwg.mxu0
    %665 = vmatprep.subr.bf16.mxu0 0
    %666 = vmatpush1.bf16.msra.mxu0 %v489
    %667 = vmatprep.subr.bf16.mxu0 0
    %668 = vmatpush1.bf16.msra.mxu0 %v490
    %669 = vmatprep.subr.bf16.mxu0 0
    %670 = vmatpush1.bf16.msra.mxu0 %v491
    %671 = vmatprep.subr.bf16.mxu0 0
    %672 = vmatpush1.bf16.msra.mxu0 %v492
    %673 = vmatprep.subr.bf16.mxu0 0
    %674 = vmatpush1.bf16.msra.mxu0 %v493
    %675 = vmatprep.subr.bf16.mxu0 0
    %676 = vmatpush1.bf16.msra.mxu0 %v494
    %677 = vmatprep.subr.bf16.mxu0 0
    %678 = vmatpush1.bf16.msra.mxu0 %v495
    %679 = vmatprep.subr.bf16.mxu0 0
    %680 = vmatpush1.bf16.msra.mxu0 %v496
    %681 = vmatprep.subr.bf16.mxu0 0
    %682 = vmatpush1.bf16.msra.mxu0 %v497
    %683 = vmatprep.subr.bf16.mxu0 0
    %684 = vmatpush1.bf16.msra.mxu0 %v498
    %685 = vmatprep.subr.bf16.mxu0 0
    %686 = vmatpush1.bf16.msra.mxu0 %v499
    %687 = vmatprep.subr.bf16.mxu0 0
    %688 = vmatpush1.bf16.msra.mxu0 %v500
    %689 = vmatprep.subr.bf16.mxu0 0
    %690 = vmatpush1.bf16.msra.mxu0 %v501
    %691 = vmatprep.subr.bf16.mxu0 0
    %692 = vmatpush1.bf16.msra.mxu0 %v502
    %693 = vmatprep.subr.bf16.mxu0 0
    %694 = vmatpush1.bf16.msra.mxu0 %v503
    %695 = vmatprep.subr.bf16.mxu0 0
    %696 = vmatpush1.bf16.msra.mxu0 %v504
    %697 = vmatprep.mubr.bf16.mxu0 %v190
    %698 = vmatmul.mubr.bf16.gmra.mrb[0].mxu0 %v189
    %v699 = vpop.f32.mrb[0].mxu0
    %v700 = vadd.f32 %v660, %v699
    %v701 = vpop.f32.mrb[0].mxu0
    %v702 = vpop.f32.mrb[0].mxu0
    %v703 = vpop.f32.mrb[0].mxu0
    %704 = vdwg.mxu0
    %705 = vmatprep.subr.bf16.mxu0 0
    %706 = vmatpush1.bf16.msra.mxu0 %v505
    %707 = vmatprep.subr.bf16.mxu0 0
    %708 = vmatpush1.bf16.msra.mxu0 %v506
    %709 = vmatprep.subr.bf16.mxu0 0
    %710 = vmatpush1.bf16.msra.mxu0 %v507
    %711 = vmatprep.subr.bf16.mxu0 0
    %712 = vmatpush1.bf16.msra.mxu0 %v508
    %713 = vmatprep.subr.bf16.mxu0 0
    %714 = vmatpush1.bf16.msra.mxu0 %v509
    %715 = vmatprep.subr.bf16.mxu0 0
    %716 = vmatpush1.bf16.msra.mxu0 %v510
    %717 = vmatprep.subr.bf16.mxu0 0
    %718 = vmatpush1.bf16.msra.mxu0 %v511
    %719 = vmatprep.subr.bf16.mxu0 0
    %720 = vmatpush1.bf16.msra.mxu0 %v512
    %721 = vmatprep.subr.bf16.mxu0 0
    %722 = vmatpush1.bf16.msra.mxu0 %v513
    %723 = vmatprep.subr.bf16.mxu0 0
    %724 = vmatpush1.bf16.msra.mxu0 %v514
    %725 = vmatprep.subr.bf16.mxu0 0
    %726 = vmatpush1.bf16.msra.mxu0 %v515
    %727 = vmatprep.subr.bf16.mxu0 0
    %728 = vmatpush1.bf16.msra.mxu0 %v516
    %729 = vmatprep.subr.bf16.mxu0 0
    %730 = vmatpush1.bf16.msra.mxu0 %v517
    %731 = vmatprep.subr.bf16.mxu0 0
    %732 = vmatpush1.bf16.msra.mxu0 %v518
    %733 = vmatprep.subr.bf16.mxu0 0
    %734 = vmatpush1.bf16.msra.mxu0 %v519
    %735 = vmatprep.subr.bf16.mxu0 0
    %736 = vmatpush1.bf16.msra.mxu0 %v520
    %737 = vmatprep.mubr.bf16.mxu0 %v192
    %738 = vmatmul.mubr.bf16.gmra.mrb[0].mxu0 %v191
    %v739 = vpop.f32.mrb[0].mxu0
    %v740 = vadd.f32 %v700, %v739
    %v741 = vpop.f32.mrb[0].mxu0
    %v742 = vpop.f32.mrb[0].mxu0
    %v743 = vpop.f32.mrb[0].mxu0
    %744 = vdwg.mxu0
    %v745 = vmax.f32 %v740, 0.0
    %v746 = vld [vmem:[%s1] sm:$0xff]
    %v747 = vld [vmem:[%s4] sm:$0xff]
    %v748 = vld [vmem:[%s4 + $0x8] sm:$0xff]
    %v749 = vld [vmem:[%s4 + $0x10] sm:$0xff]
    %v750 = vld [vmem:[%s4 + $0x18] sm:$0xff]
    %v751 = vld [vmem:[%s4 + $0x20] sm:$0xff]
    %v752 = vld [vmem:[%s4 + $0x28] sm:$0xff]
    %v753 = vld [vmem:[%s4 + $0x30] sm:$0xff]
    %v754 = vld [vmem:[%s4 + $0x38] sm:$0xff]
    %v755 = vld [vmem:[%s4 + $0x40] sm:$0xff]
    %v756 = vld [vmem:[%s4 + $0x48] sm:$0xff]
    %v757 = vld [vmem:[%s4 + $0x50] sm:$0xff]
    %v758 = vld [vmem:[%s4 + $0x58] sm:$0xff]
    %v759 = vld [vmem:[%s4 + $0x60] sm:$0xff]
    %v760 = vld [vmem:[%s4 + $0x68] sm:$0xff]
    %v761 = vld [vmem:[%s4 + $0x70] sm:$0xff]
    %v762 = vld [vmem:[%s4 + $0x78] sm:$0xff]
    %v763 = vld [vmem:[%s5] sm:$0x1]
    %765 = vset.pattern.permute.xlu0 0
    %766 = vperm.xlu0 %765, %v746
    %v767 = vpop.permute.xlu0 %766
    %v769 = vlaneseq
    %v770 = vshrl.u32 %v769, 7
    %v771 = vsub.s32 0, %v770
    %v772 = vrot.slane %v763, %v771
    %v773 = vmul.f32 %v767, %v772
    %774 = vmatprep.subr.mxu0 0.0
    %775 = vmatpush1.msra.mxu0 %v747
    %776 = vmatprep.subr.mxu0 0.0
    %777 = vmatpush1.msra.mxu0 %v748
    %778 = vmatprep.subr.mxu0 0.0
    %779 = vmatpush1.msra.mxu0 %v749
    %780 = vmatprep.subr.mxu0 0.0
    %781 = vmatpush1.msra.mxu0 %v750
    %782 = vmatprep.subr.mxu0 0.0
    %783 = vmatpush1.msra.mxu0 %v751
    %784 = vmatprep.subr.mxu0 0.0
    %785 = vmatpush1.msra.mxu0 %v752
    %786 = vmatprep.subr.mxu0 0.0
    %787 = vmatpush1.msra.mxu0 %v753
    %788 = vmatprep.subr.mxu0 0.0
    %789 = vmatpush1.msra.mxu0 %v754
    %790 = vmatprep.subr.mxu0 0.0
    %791 = vmatpush1.msra.mxu0 %v755
    %792 = vmatprep.subr.mxu0 0.0
    %793 = vmatpush1.msra.mxu0 %v756
    %794 = vmatprep.subr.mxu0 0.0
    %795 = vmatpush1.msra.mxu0 %v757
    %796 = vmatprep.subr.mxu0 0.0
    %797 = vmatpush1.msra.mxu0 %v758
    %798 = vmatprep.subr.mxu0 0.0
    %799 = vmatpush1.msra.mxu0 %v759
    %800 = vmatprep.subr.mxu0 0.0
    %801 = vmatpush1.msra.mxu0 %v760
    %802 = vmatprep.subr.mxu0 0.0
    %803 = vmatpush1.msra.mxu0 %v761
    %804 = vmatprep.subr.mxu0 0.0
    %805 = vmatpush1.msra.mxu0 %v762
    %806 = vmatprep.subr.mxu0 0.0
    %807 = vmatpush1.msra.mxu0 0.0
    %808 = vmatprep.subr.mxu0 0.0
    %809 = vmatpush1.msra.mxu0 0.0
    %810 = vmatprep.subr.mxu0 0.0
    %811 = vmatpush1.msra.mxu0 0.0
    %812 = vmatprep.subr.mxu0 0.0
    %813 = vmatpush1.msra.mxu0 0.0
    %814 = vmatprep.subr.mxu0 0.0
    %815 = vmatpush1.msra.mxu0 0.0
    %816 = vmatprep.subr.mxu0 0.0
    %817 = vmatpush1.msra.mxu0 0.0
    %818 = vmatprep.subr.mxu0 0.0
    %819 = vmatpush1.msra.mxu0 0.0
    %820 = vmatprep.subr.mxu0 0.0
    %821 = vmatpush1.msra.mxu0 0.0
    %822 = vmatprep.subr.mxu0 0.0
    %823 = vmatpush1.msra.mxu0 0.0
    %824 = vmatprep.subr.mxu0 0.0
    %825 = vmatpush1.msra.mxu0 0.0
    %826 = vmatprep.subr.mxu0 0.0
    %827 = vmatpush1.msra.mxu0 0.0
    %828 = vmatprep.subr.mxu0 0.0
    %829 = vmatpush1.msra.mxu0 0.0
    %830 = vmatprep.subr.mxu0 0.0
    %831 = vmatpush1.msra.mxu0 0.0
    %832 = vmatprep.subr.mxu0 0.0
    %833 = vmatpush1.msra.mxu0 0.0
    %834 = vmatprep.subr.mxu0 0.0
    %835 = vmatpush1.msra.mxu0 0.0
    %836 = vmatprep.subr.mxu0 0.0
    %837 = vmatpush1.msra.mxu0 0.0
    %838 = vmatprep.mubr.f32.mxu0 0.0
    %839 = vmatmul.mubr.f32.gmra.mrb[0].mxu0 %v745
    %v840 = vpop.f32.mrb[0].mxu0
    %v841 = vadd.f32 %v773, %v840
    %v842 = vpop.f32.mrb[0].mxu0
    %843 = vdwg.mxu0
    %v844 = vld [vmem:[%s5 + $0x1] sm:$0x1]
    %845 = vset.pattern.permute.xlu0 1
    %846 = vperm.xlu0 %845, %v746
    %v847 = vpop.permute.xlu0 %846
    %v849 = vlaneseq
    %v850 = vshrl.u32 %v849, 7
    %v851 = vsub.s32 0, %v850
    %v852 = vrot.slane %v844, %v851
    %v853 = vmul.f32 %v847, %v852
    %v854 = vadd.f32 %v841, %v853
    %v855 = vld [vmem:[%s6] sm:$0x1]
    %v857 = vlaneseq
    %v858 = vshrl.u32 %v857, 7
    %v859 = vsub.s32 0, %v858
    %v860 = vrot.slane %v855, %v859
    %v862 = vadd.f32 %v854, %v860
    %v863 = vtanh.pop %v862
    %v864 = vadd.f32 %v863, 1.0
    %v865 = vmul.f32 %v864, 6.0
    %v866 = vadd.f32 %v865, -10.0
    %v867 = vmul.f32 %v866, 1.442695
    %v868 = vpow.pop %v867
    %v869 = vld [vmem:[%s2] sm:$0xff]
    %871 = vrot.lane.b32.xlu0 %v868, 120
    %v872 = vpop.permute.xlu0 %871
    %v874 = vmul.f32 %v869, %v872
    %v875 = vadd.f32 %v862, %v874
    %v876 = vmul.f32 %v869, -0.5
    %v877 = vmul.f32 %v876, %v869
    %879 = vrot.lane.b32.xlu0 %v866, 120
    %v880 = vpop.permute.xlu0 %879
    %v882 = vsub.f32 %v877, %v880
    %vm883 = vcmask 64512
    %v884 = vsel %vm883, %v882, 0.0
    %885 = vadd.xlane.f32.xlu0 %v884
    %v886 = vpop.xlane.xlu0 %885
    %v887 = vsub.f32 %v886, 7.351508
    %v888 = vtanh.pop %v875
    %v889 = vmul.f32 %v888, %v888
    %v890 = vsub.f32 1.0, %v889
    %v891 = vmax.f32 %v890, 0.0
    %v892 = vadd.f32 %v891, 1e-06
    %v893 = vlog2.pop %v892
    %v894 = vmul.f32 %v893, 0.6931472
    %v895 = vsel %vm883, %v894, 0.0
    %896 = vadd.xlane.f32.xlu0 %v895
    %v897 = vpop.xlane.xlu0 %896
    %v898 = vsub.f32 %v887, %v897
    %900 = vrot.lane.b32.xlu0 %v888, 8
    %v901 = vpop.permute.xlu0 %900
    %903 = vrot.lane.b32.xlu0 %v866, 8
    %v904 = vpop.permute.xlu0 %903
    %v906 = vsel %vm883, %v863, %v901
    %vm907 = vcmask 130048
    %v908 = vsel %vm907, %v906, %v904
    %vm909 = vcmask 195584
    %v910 = vsel %vm909, %v908, %v898
    %vm911 = vcmask 261120
    %912 = vst.msk [vmem:[%s7] sm:$0xff] %vm911, %v910
    // Predicated region
    $region34: #{actor_forward.1} parent=1 // pred_check
      _
    $region35: #{actor_forward.1} parent=1 // pred_check_branch
      %914 = sbr.rel (0) target = $region37
    $region36: #{actor_forward.1} parent=1 // pred_region
      _
    $region37: #{actor_forward.1} parent=1 // pred_fallthru
      _
    // Predicated region
    $region38: #{actor_forward.1} parent=1 // pred_check
      _
    $region39: #{actor_forward.1} parent=1 // pred_check_branch
      %916 = sbr.rel (0) target = $region41
    $region40: #{actor_forward.1} parent=1 // pred_region
      _
    $region41: #{actor_forward.1} parent=1 // pred_fallthru
      _
    %917 = vsyncpa [#allocation3], 1

</llo_original>
